<compile_context>
chip_gen: v5e
topology: v5e:2x2
jax: 0.10.0
libtpu: 0.0.40
codegen_flags: <defaults>
</compile_context>

<pallas_src>
import functools

import jax
import jax.numpy as jnp
from jax.experimental import pallas as pl
from jax.experimental.pallas import tpu as pltpu


def _nn_kernel(x_ref, w_ref, b_ref, o_ref, *, slope):
    # x_ref: [TB, F] VMEM tile (pipelined), w_ref: [1, F] VMEM (resident),
    # b_ref: [1] SMEM scalar, o_ref: [TB, 1] VMEM output tile.
    x = x_ref[...]                                      # [TB, F]
    w = w_ref[...]                                      # [1, F]
    b = b_ref[0]                                        # scalar
    # Weighted sum over features on the VPU/XLU (MXU would waste 127/255 output
    # columns for out_features == 1; kernel is mem-bound anyway).
    z = jnp.sum(x * w, axis=-1, keepdims=True) + b      # [TB, 1]
    o_ref[...] = jnp.exp(slope * (z * z))


def _pick_block_b(B, F):
    """Largest batch tile within a conservative double-buffered VMEM budget."""
    budget = 8 * 1024 * 1024                 # fits default scoped VMEM on all gens
    per_row = F * 4 + 512                    # f32 x row + lane-padded (TB,1) out row
    tb = 4096                                # big tiles amortize ~0.35us/step overhead
    while tb > 8 and 2 * tb * per_row > budget:
        tb //= 2
    return B if B <= tb else tb


def nn_forward(x, weight, bias, slope=-0.05, block_b=None):
    """
    x:      [B, F] float32
    weight: [1, F] float32 (PyTorch nn.Linear(out_features=1) layout);
            (F,) or (F, 1) are also accepted.
    bias:   [1] float32 (or scalar)
    returns [B, 1] float32 = exp(slope * (x @ weight.T + bias)^2)
    """
    x = jnp.asarray(x, jnp.float32)
    B, F = x.shape

    weight = jnp.asarray(weight, jnp.float32)
    if weight.size != F:
        raise ValueError(f"weight has {weight.size} elements, expected {F}")
    w = weight.reshape(1, F)                              # lane-dense weight row
    b = jnp.asarray(bias, jnp.float32).reshape(1)

    tb = _pick_block_b(B, F) if block_b is None else block_b
    grid = (pl.cdiv(B, tb),)

    kernel = functools.partial(_nn_kernel, slope=float(slope))

    return pl.pallas_call(
        kernel,
        out_shape=jax.ShapeDtypeStruct((B, 1), jnp.float32),
        grid_spec=pltpu.PrefetchScalarGridSpec(
            num_scalar_prefetch=0,
            grid=grid,
            in_specs=[
                pl.BlockSpec((tb, F), lambda i: (i, 0)),            # x: pipelined batch tiles
                pl.BlockSpec((1, F), lambda i: (0, 0)),             # weight: resident
                pl.BlockSpec(memory_space=pltpu.MemorySpace.SMEM),  # bias: scalar in SMEM
            ],
            out_specs=pl.BlockSpec((tb, 1), lambda i: (i, 0)),
        ),
        compiler_params=pltpu.CompilerParams(
            # Batch tiles are independent -> shard grid across TensorCores (2x on v7x).
            dimension_semantics=("parallel",),
            vmem_limit_bytes=32 * 1024 * 1024,
        ),
    )(x, w, b)
    # TODO(synk): for very small F a fully lane-dense output layout (store [1, TB]
    # tiles and reshape in the wrapper) would avoid masked (TB,1) stores entirely;
    # kept the [B,1] layout here since output traffic is only 1/F of input traffic.


if __name__ == "__main__":
    key = jax.random.PRNGKey(0)
    slope = -0.05

    def reference(x, weight, bias):
        return jnp.exp(slope * jnp.square(x @ weight.reshape(1, -1).T + bias.reshape(1)))

    # Second case forces a small block to exercise the multi-tile pipelined path.
    for (B, F, blk) in [(8, 32, None), (64, 32, 16)]:
        key, kx, kw, kb = jax.random.split(key, 4)
        x = jax.random.normal(kx, (B, F), dtype=jnp.float32)
        bound = 1.0 / (F ** 0.5)
        weight = jax.random.uniform(kw, (1, F), minval=-bound, maxval=bound, dtype=jnp.float32)
        bias = jax.random.uniform(kb, (1,), minval=-bound, maxval=bound, dtype=jnp.float32)

        out = jax.block_until_ready(nn_forward(x, weight, bias, slope, block_b=blk))
        ref = reference(x, weight, bias)
        assert out.shape == (B, 1), out.shape
        assert jnp.allclose(out, ref, atol=1e-5, rtol=1e-5)

    print("KERNEL_OK")
</pallas_src>

<mosaic_0001>
module attributes {stable_mosaic.version = 11 : i64} {
  func.func @_nn_kernel(%arg0: i32, %arg1: memref<8x32xf32, #tpu.memory_space<vmem>>, %arg2: memref<1x32xf32, #tpu.memory_space<vmem>>, %arg3: memref<1xf32, #tpu.memory_space<smem>>, %arg4: memref<8x1xf32, #tpu.memory_space<vmem>>) attributes {dimension_semantics = [#tpu.dimension_semantics<parallel>], iteration_bounds = array<i64: 1>, scalar_prefetch = 0 : i64, scratch_operands = 0 : i64, tpu.core_type = #tpu.core_type<tc>, window_params = [{transform_indices = @transform_0, window_bounds = array<i64: 8, 32>}, {pipeline_mode = #tpu.pipeline_mode<synchronous>, transform_indices = @transform_1, window_bounds = array<i64: 1, 32>}, {transform_indices = @transform_2, window_bounds = array<i64: 1>}, {transform_indices = @transform_3, window_bounds = array<i64: 8, 1>}]} {
    %c0 = arith.constant 0 : index
    %c0_0 = arith.constant 0 : index
    %0 = vector.load %arg1[%c0, %c0_0] : memref<8x32xf32, #tpu.memory_space<vmem>>, vector<8x32xf32>
    %c0_1 = arith.constant 0 : index
    %c0_2 = arith.constant 0 : index
    %1 = vector.load %arg2[%c0_1, %c0_2] : memref<1x32xf32, #tpu.memory_space<vmem>>, vector<1x32xf32>
    %c0_3 = arith.constant 0 : index
    %2 = memref.load %arg3[%c0_3] : memref<1xf32, #tpu.memory_space<smem>>
    %3 = vector.broadcast %1 : vector<1x32xf32> to vector<8x32xf32>
    %4 = arith.mulf %0, %3 : vector<8x32xf32>
    %cst = arith.constant dense<0.000000e+00> : vector<8xf32>
    %5 = vector.multi_reduction <add>, %4, %cst [1] : vector<8x32xf32> to vector<8xf32>
    %6 = vector.shape_cast %5 : vector<8xf32> to vector<8x1xf32>
    %7 = vector.broadcast %2 : f32 to vector<8x1xf32>
    %8 = arith.addf %6, %7 : vector<8x1xf32>
    %9 = arith.mulf %8, %8 : vector<8x1xf32>
    %cst_4 = arith.constant -5.000000e-02 : f32
    %10 = vector.broadcast %cst_4 : f32 to vector<8x1xf32>
    %11 = arith.mulf %10, %9 : vector<8x1xf32>
    %12 = math.exp %11 : vector<8x1xf32>
    %c0_5 = arith.constant 0 : index
    %c0_6 = arith.constant 0 : index
    %13 = vector.load %arg4[%c0_5, %c0_6] : memref<8x1xf32, #tpu.memory_space<vmem>>, vector<8x1xf32>
    tpu.vector_store %arg4[%c0_5, %c0_6], %12 {strides = array<i32>} : memref<8x1xf32, #tpu.memory_space<vmem>>, vector<8x1xf32>,
    return
  }
  func.func @transform_0(%arg0: i32) -> (i32, i32) {
    %c0_i32 = arith.constant 0 : i32
    %c0_i32_0 = arith.constant 0 : i32
    return %arg0, %c0_i32 : i32, i32
  }
  func.func @transform_1(%arg0: i32) -> (i32, i32) {
    %c0_i32 = arith.constant 0 : i32
    %c0_i32_0 = arith.constant 0 : i32
    %c0_i32_1 = arith.constant 0 : i32
    return %c0_i32, %c0_i32_0 : i32, i32
  }
  func.func @transform_2(%arg0: i32) -> i32 {
    %c0_i32 = arith.constant 0 : i32
    %c0_i32_0 = arith.constant 0 : i32
    return %c0_i32 : i32
  }
  func.func @transform_3(%arg0: i32) -> (i32, i32) {
    %c0_i32 = arith.constant 0 : i32
    %c0_i32_0 = arith.constant 0 : i32
    return %arg0, %c0_i32 : i32, i32
  }
}

</mosaic_0001>

<llo_original>
// kernel: tpu_custom_call.1
$region0: #{tpu_custom_call.1}
  #allocation0 [shape = 'u32[]', space=smem, size = 0x4, offset = 0x4, fixed_abs, tag = 'smem constant byte address 0x4 - core index']
  #allocation1 [shape = 'u32[72,128]{1,0:T(1,128)}', space=vmem, size = 0x9000, scoped, tag = 'internal scratch']
  #allocation2 [shape = 'f32[1]{0:T(128)S(6)}', space=smem, size = 0x200, scoped, tag = 'scoped memory for tpu_custom_call.1']
  %s0 = inlined_call_operand.hbm [shape: f32[8,32], index: 0, kind: input, shape index: {}]
  %s1 = inlined_call_operand.vmem [shape: f32[1,32], index: 1, kind: input, shape index: {}]
  %s2 = inlined_call_operand.<no memory space> [shape: f32[1], index: 2, kind: input, shape index: {}]
  %s3 = inlined_call_operand.vmem [shape: f32[8,1], index: 3, kind: output, shape index: {}]
  %s4 = sld [smem:[#allocation0]]
  $region26: #{tpu_custom_call.1} parent=0
    _
  %s6 = ssub.s32 1, %s4
  %s7 = scalar_select 0, %s6, %s4
  %8 = sst [smem:[#allocation2]] %s2
  $region1: #{tpu_custom_call.1} parent=0
    #allocation3 [shape = 'u8[4096]{0}', space=vmem, size = 0x1000, scoped, tag = 'input window, operand 0, single buffered']
    #allocation4 [shape = 's32[1]{0}', space=sflag, size = 0x4, scoped, tag = 'scoped memory for tpu_custom_call.1']
    %9 = vsyncpa [#allocation4], 0
    // Predicated region
    $region2: #{tpu_custom_call.1} parent=1 // pred_check
      _
    $region3: #{tpu_custom_call.1} parent=1 // pred_check_branch
      %11 = sbr.rel (0) target = $region5
    $region4: #{tpu_custom_call.1} parent=1 // pred_region
      %13 = vsyncadd [#allocation4], 0
      %s15 = sshll.u32 %s0, 4
      %s16 = int_to_ptr.hbm [resolvable:$true] %s15
      %s17 = sshll.u32 [#allocation3], 4
      %s18 = int_to_ptr.vmem [resolvable:$true] %s17
      %20 = dma.hbm_to_vmem [thread:$0]  %s16, 128, %s18, [#allocation4]
    $region5: #{tpu_custom_call.1} parent=1 // pred_fallthru
      _
    // Predicated region
    $region6: #{tpu_custom_call.1} parent=1 // pred_check
      _
    $region7: #{tpu_custom_call.1} parent=1 // pred_check_branch
      %22 = sbr.rel (0) target = $region9
    $region8: #{tpu_custom_call.1} parent=1 // pred_region
      _
    $region9: #{tpu_custom_call.1} parent=1 // pred_fallthru
      _
    // Predicated region
    $region10: #{tpu_custom_call.1} parent=1 // pred_check
      _
    $region11: #{tpu_custom_call.1} parent=1 // pred_check_branch
      %24 = sbr.rel (0) target = $region13
    $region12: #{tpu_custom_call.1} parent=1 // pred_region
      _
    $region13: #{tpu_custom_call.1} parent=1 // pred_fallthru
      _
    // Predicated region
    $region14: #{tpu_custom_call.1} parent=1 // pred_check
      _
    $region15: #{tpu_custom_call.1} parent=1 // pred_check_branch
      %26 = sbr.rel (0) target = $region17
    $region16: #{tpu_custom_call.1} parent=1 // pred_region
      %28 = dma.done [#allocation4], 128
    $region17: #{tpu_custom_call.1} parent=1 // pred_fallthru
      _
    %v29 = vld [vmem:[#allocation3] sm:$0xff]
    %v30 = vld [vmem:[%s1] sm:$0x1]
    %s31 = sld [smem:[#allocation2]]
    %v33 = vperm.slane %v30, 0
    %v35 = vmul.f32 %v29, %v33
    %vm36 = vcmask 261120
    %v37 = vsel %vm36, %v35, 0.0
    %38 = vadd.xlane.f32.xlu0 %v37
    %v39 = vpop.xlane.xlu0 %38
    %v40 = vstv %s31
    %v41 = vadd.f32 %v39, %v40
    %v42 = vmul.f32 %v41, %v41
    %v43 = vmul.f32 %v42, -0.05
    %v44 = vmul.f32 %v43, 1.442695
    %v45 = vpow.pop %v44
    %vm46 = vcmask 7168
    %47 = vst.msk [vmem:[%s3] sm:$0xff] %vm46, %v45
    // Predicated region
    $region18: #{tpu_custom_call.1} parent=1 // pred_check
      _
    $region19: #{tpu_custom_call.1} parent=1 // pred_check_branch
      %49 = sbr.rel (0) target = $region21
    $region20: #{tpu_custom_call.1} parent=1 // pred_region
      _
    $region21: #{tpu_custom_call.1} parent=1 // pred_fallthru
      _
    // Predicated region
    $region22: #{tpu_custom_call.1} parent=1 // pred_check
      _
    $region23: #{tpu_custom_call.1} parent=1 // pred_check_branch
      %51 = sbr.rel (0) target = $region25
    $region24: #{tpu_custom_call.1} parent=1 // pred_region
      _
    $region25: #{tpu_custom_call.1} parent=1 // pred_fallthru
      _
    %52 = vsyncpa [#allocation4], 1

</llo_original>
